<compile_context>
chip_gen: v7x
topology: tpu7x:2x2x1
jax: 0.10.0
libtpu: 0.0.40
codegen_flags: <defaults>
</compile_context>

<pallas_src>
import functools

import jax
import jax.numpy as jnp
from jax.experimental import pallas as pl
from jax.experimental.pallas import tpu as pltpu

INPUT_SIZE = 63
HIDDEN1 = 64
HIDDEN2 = 32
HIDDEN_PAD = 128      # lane-padded hidden width (one full vreg lane group)
NUM_CLASSES = 10      # TODO(synk): original loads len(np.load('Model/label_encoder_classes.npy'))
BN_EPS = 1e-5


def _round_up(n, m):
    return ((n + m - 1) // m) * m


# ----------------------------------------------------------------------------- kernel
def gesture_net_kernel(x_ref, w1_ref, b1_ref, w2_ref, w3_ref, o_ref):
    # x_ref: (tile, 63) f32 straight from HBM; cast to bf16 here (no wrapper pass).
    x = x_ref[...].astype(jnp.bfloat16)

    # fc1 + bn1 (folded into w1/b1).  b1 is lane-padded to 128 with a 1.0 at
    # column 64: after relu, h1[:, 64] == 1.0 and carries fc2's bias through the
    # next matmul.  Columns 65..127 stay exactly 0.
    h1 = jnp.dot(x, w1_ref[...], preferred_element_type=jnp.float32) + b1_ref[...]
    h1 = jnp.maximum(h1, 0.0)
    # dropout1: identity in eval mode

    # fc2 + bn2 (folded; bias fused via h1 column 64) -> relu.
    # h2[:, 32] == 1.0 (constant injector) and carries fc3's bias.
    h2 = jnp.dot(h1.astype(jnp.bfloat16), w2_ref[...],
                 preferred_element_type=jnp.float32)
    h2 = jnp.maximum(h2, 0.0)
    # dropout2: identity in eval mode

    # fc3 (bias fused via h2 column 32) -> logits.
    o_ref[...] = jnp.dot(h2.astype(jnp.bfloat16), w3_ref[...],
                         preferred_element_type=jnp.float32)


# ----------------------------------------------------------------------------- wrapper
@functools.partial(jax.jit, static_argnames=("tile_b",))
def gesture_net_forward(x, folded_params, *, tile_b=2048):
    """x: (B, INPUT_SIZE) float32 (bf16 also accepted, halves the HBM read).
    Returns (B, NUM_CLASSES) float32 logits."""
    w1p, b1p, w2p, w3p = folded_params
    B = x.shape[0]
    num_classes = w3p.shape[1]

    # Batch tiling: multiple of 16 (bf16 sublane packing).  Aim for >=4 grid steps
    # so the "parallel" batch axis can shard across both TensorCores on v7x and the
    # input DMA pipelines against compute; cap per-step rows at tile_b for VMEM.
    B16 = _round_up(B, 16)
    tile = min(_round_up(tile_b, 16), max(16, _round_up(pl.cdiv(B16, 4), 16)))
    B_pad = _round_up(B, tile)
    x_pad = jnp.pad(x, ((0, B_pad - B), (0, 0))) if B_pad != B else x

    def full(arr):  # resident (un-tiled) parameter spec
        return pl.BlockSpec(arr.shape, lambda i: (0, 0))

    # Advisory cost hint (useful MACs only; padded lanes are free on the MXU).
    cost = pl.CostEstimate(
        flops=2 * B_pad * (INPUT_SIZE * HIDDEN1 + HIDDEN1 * HIDDEN2
                           + HIDDEN2 * num_classes),
        transcendentals=0,
        bytes_accessed=B_pad * (INPUT_SIZE * x.dtype.itemsize + num_classes * 4)
                       + sum(int(a.size) * a.dtype.itemsize
                             for a in (w1p, b1p, w2p, w3p)),
    )

    out = pl.pallas_call(
        gesture_net_kernel,
        out_shape=jax.ShapeDtypeStruct((B_pad, num_classes), jnp.float32),
        grid_spec=pltpu.PrefetchScalarGridSpec(
            num_scalar_prefetch=0,
            grid=(B_pad // tile,),
            in_specs=[
                pl.BlockSpec((tile, INPUT_SIZE), lambda i: (i, 0)),  # x, batch-tiled
                full(w1p), full(b1p), full(w2p), full(w3p),          # resident params
            ],
            out_specs=pl.BlockSpec((tile, num_classes), lambda i: (i, 0)),
        ),
        compiler_params=pltpu.CompilerParams(
            # Batch axis is independent -> shards across both TensorCores on v7x.
            dimension_semantics=("parallel",),
            # Per-step VMEM at tile=2048 is ~9 MiB: x block lane-pads 63->128 f32
            # (1 MiB x2 buffers), output block lane-pads 10->128 f32 (1 MiB x2),
            # plus ~4 MiB of f32/bf16 h1/h2 temporaries and tiny resident weights.
            # 32 MiB scoped limit keeps headroom on every generation (incl. v5e's
            # 16 MiB default) and leaves room for tile_b=4096 on large batches.
            vmem_limit_bytes=32 * 1024 * 1024,
        ),
        cost_estimate=cost,
    )(x_pad, w1p, b1p, w2p, w3p)
    # Zero-padded batch rows produce garbage logits; this slice must be kept.
    return out[:B]


# ----------------------------------------------------------------------------- params
def init_params(key):
    """Deterministic synthetic parameters matching GestureNet.__init__ shapes.

    Linear weights are already transposed to (in, out); BatchNorm params are raw
    (gamma, beta, running_mean, running_var) and folded later.
    """
    ks = jax.random.split(key, 12)

    w1 = jax.random.normal(ks[0], (INPUT_SIZE, HIDDEN1), jnp.float32) * 0.1
    b1 = jax.random.normal(ks[1], (1, HIDDEN1), jnp.float32) * 0.1
    w2 = jax.random.normal(ks[2], (HIDDEN1, HIDDEN2), jnp.float32) * 0.1
    b2 = jax.random.normal(ks[3], (1, HIDDEN2), jnp.float32) * 0.1
    w3 = jax.random.normal(ks[4], (HIDDEN2, NUM_CLASSES), jnp.float32) * 0.1
    b3 = jax.random.normal(ks[5], (1, NUM_CLASSES), jnp.float32) * 0.1

    g1 = jax.random.normal(ks[6], (1, HIDDEN1), jnp.float32) * 0.1 + 1.0
    be1 = jax.random.normal(ks[7], (1, HIDDEN1), jnp.float32) * 0.1
    rm1 = jax.random.normal(ks[8], (1, HIDDEN1), jnp.float32) * 0.1
    rv1 = jnp.abs(jax.random.normal(ks[9], (1, HIDDEN1), jnp.float32)) * 0.1 + 1.0

    g2 = jax.random.normal(ks[10], (1, HIDDEN2), jnp.float32) * 0.1 + 1.0
    be2 = jax.random.normal(ks[11], (1, HIDDEN2), jnp.float32) * 0.1
    rm2 = jnp.zeros((1, HIDDEN2), jnp.float32)
    rv2 = jnp.ones((1, HIDDEN2), jnp.float32)

    return (w1, b1, g1, be1, rm1, rv1, w2, b2, g2, be2, rm2, rv2, w3, b3)


def fold_params(raw):
    """Fold BN into the linears; lane-pad hidden widths to 128 and plant constant-1
    injector columns so fc2's and fc3's biases ride inside the matmuls."""
    (w1, b1, g1, be1, rm1, rv1, w2, b2, g2, be2, rm2, rv2, w3, b3) = raw
    s1 = g1 / jnp.sqrt(rv1 + BN_EPS)
    t1 = be1 - rm1 * s1
    s2 = g2 / jnp.sqrt(rv2 + BN_EPS)
    t2 = be2 - rm2 * s2
    num_classes = w3.shape[1]

    # fc1 (+bn1): (63, 128); cols 0..63 real, rest zero.
    w1p = jnp.zeros((INPUT_SIZE, HIDDEN_PAD), jnp.float32).at[:, :HIDDEN1].set(w1 * s1)
    # fc1 bias (+bn1 shift): (1, 128); col 64 = 1.0 constant injector.
    b1p = jnp.zeros((1, HIDDEN_PAD), jnp.float32).at[:, :HIDDEN1].set(b1 * s1 + t1)
    b1p = b1p.at[0, HIDDEN1].set(1.0)

    # fc2 (+bn2): (128, 128); row 64 carries fc2's folded bias, [64, 32] = 1.0
    # re-injects the constant so h2 col 32 stays 1.0 for fc3's bias.
    w2p = jnp.zeros((HIDDEN_PAD, HIDDEN_PAD), jnp.float32)
    w2p = w2p.at[:HIDDEN1, :HIDDEN2].set(w2 * s2)
    w2p = w2p.at[HIDDEN1, :HIDDEN2].set((b2 * s2 + t2)[0])
    w2p = w2p.at[HIDDEN1, HIDDEN2].set(1.0)

    # fc3: (128, num_classes); row 32 carries fc3's bias.
    w3p = jnp.zeros((HIDDEN_PAD, num_classes), jnp.float32)
    w3p = w3p.at[:HIDDEN2, :].set(w3)
    w3p = w3p.at[HIDDEN2, :].set(b3[0])

    return (w1p.astype(jnp.bfloat16), b1p.astype(jnp.float32),
            w2p.astype(jnp.bfloat16), w3p.astype(jnp.bfloat16))


# ----------------------------------------------------------------------------- refs
def reference_forward_f32(x, raw):
    """Un-folded f32 reference matching the PyTorch eval-mode forward."""
    (w1, b1, g1, be1, rm1, rv1, w2, b2, g2, be2, rm2, rv2, w3, b3) = raw
    h1 = x @ w1 + b1
    h1 = (h1 - rm1) / jnp.sqrt(rv1 + BN_EPS) * g1 + be1
    h1 = jnp.maximum(h1, 0.0)
    h2 = h1 @ w2 + b2
    h2 = (h2 - rm2) / jnp.sqrt(rv2 + BN_EPS) * g2 + be2
    h2 = jnp.maximum(h2, 0.0)
    return h2 @ w3 + b3


def reference_forward_folded(x, folded):
    """bf16-matched reference doing the exact math the kernel performs."""
    w1p, b1p, w2p, w3p = folded
    h1 = jnp.maximum(jnp.dot(x.astype(jnp.bfloat16), w1p,
                             preferred_element_type=jnp.float32) + b1p, 0.0)
    h2 = jnp.maximum(jnp.dot(h1.astype(jnp.bfloat16), w2p,
                             preferred_element_type=jnp.float32), 0.0)
    return jnp.dot(h2.astype(jnp.bfloat16), w3p, preferred_element_type=jnp.float32)


# ----------------------------------------------------------------------------- main
if __name__ == "__main__":
    key = jax.random.PRNGKey(0)
    kx, kp = jax.random.split(key)

    raw_params = init_params(kp)
    folded_params = fold_params(raw_params)

    # Non-multiple-of-tile batch: exercises the cdiv/padding path and yields a
    # multi-step grid (tile=32, 4 steps) so pipelining / megacore sharding engage.
    B = 100
    x = jax.random.normal(kx, (B, INPUT_SIZE), jnp.float32)
    out = jax.block_until_ready(gesture_net_forward(x, folded_params))
    assert out.shape == (B, NUM_CLASSES)

    # Tight check vs a reference doing the same bf16/f32 fused math.
    ref_folded = reference_forward_folded(x, folded_params)
    assert jnp.allclose(out, ref_folded, atol=2e-3, rtol=2e-3), "mismatch vs folded ref"
    # Loose semantic check vs the original (un-folded, f32) eval-mode forward.
    ref_f32 = reference_forward_f32(x, raw_params)
    assert jnp.allclose(out, ref_f32, atol=5e-2, rtol=5e-2), "mismatch vs f32 reference"

    # Larger batch with an explicit tile cap: multi-step grid on the parallel axis.
    B2 = 400
    x2 = jax.random.normal(jax.random.PRNGKey(1), (B2, INPUT_SIZE), jnp.float32)
    out2 = jax.block_until_ready(gesture_net_forward(x2, folded_params, tile_b=128))
    assert out2.shape == (B2, NUM_CLASSES)
    assert jnp.allclose(out2, reference_forward_folded(x2, folded_params),
                        atol=2e-3, rtol=2e-3), "mismatch on multi-tile batch"

    print("KERNEL_OK")
</pallas_src>

<mosaic_0001>
module attributes {stable_mosaic.version = 11 : i64} {
  func.func @gesture_net_kernel(%arg0: i32, %arg1: memref<32x63xf32, #tpu.memory_space<vmem>>, %arg2: memref<63x128xbf16, #tpu.memory_space<vmem>>, %arg3: memref<1x128xf32, #tpu.memory_space<vmem>>, %arg4: memref<128x128xbf16, #tpu.memory_space<vmem>>, %arg5: memref<128x10xbf16, #tpu.memory_space<vmem>>, %arg6: memref<32x10xf32, #tpu.memory_space<vmem>>) attributes {dimension_semantics = [#tpu.dimension_semantics<parallel>], iteration_bounds = array<i64: 4>, scalar_prefetch = 0 : i64, scratch_operands = 0 : i64, tpu.core_type = #tpu.core_type<tc>, window_params = [{transform_indices = @transform_0, window_bounds = array<i64: 32, 63>}, {pipeline_mode = #tpu.pipeline_mode<synchronous>, transform_indices = @transform_1, window_bounds = array<i64: 63, 128>}, {pipeline_mode = #tpu.pipeline_mode<synchronous>, transform_indices = @transform_2, window_bounds = array<i64: 1, 128>}, {pipeline_mode = #tpu.pipeline_mode<synchronous>, transform_indices = @transform_3, window_bounds = array<i64: 128, 128>}, {pipeline_mode = #tpu.pipeline_mode<synchronous>, transform_indices = @transform_4, window_bounds = array<i64: 128, 10>}, {transform_indices = @transform_5, window_bounds = array<i64: 32, 10>}]} {
    %c0 = arith.constant 0 : index
    %c0_0 = arith.constant 0 : index
    %0 = vector.load %arg1[%c0, %c0_0] : memref<32x63xf32, #tpu.memory_space<vmem>>, vector<32x63xf32>
    %1 = arith.truncf %0 : vector<32x63xf32> to vector<32x63xbf16>
    %c0_1 = arith.constant 0 : index
    %c0_2 = arith.constant 0 : index
    %2 = vector.load %arg2[%c0_1, %c0_2] : memref<63x128xbf16, #tpu.memory_space<vmem>>, vector<63x128xbf16>
    %cst = arith.constant dense<0.000000e+00> : vector<32x128xf32>
    %3 = tpu.matmul %1, %2, %cst {dimension_numbers = #tpu.dot_dimension_numbers<[1], [0], [0], [1], [0, 0, 1, 1], [], []>} : vector<32x63xbf16>, vector<63x128xbf16>, vector<32x128xf32> -> vector<32x128xf32>
    %c0_3 = arith.constant 0 : index
    %c0_4 = arith.constant 0 : index
    %4 = vector.load %arg3[%c0_3, %c0_4] : memref<1x128xf32, #tpu.memory_space<vmem>>, vector<1x128xf32>
    %5 = vector.broadcast %4 : vector<1x128xf32> to vector<32x128xf32>
    %6 = arith.addf %3, %5 : vector<32x128xf32>
    %cst_5 = arith.constant 0.000000e+00 : f32
    %7 = vector.broadcast %cst_5 : f32 to vector<32x128xf32>
    %8 = arith.maximumf %6, %7 : vector<32x128xf32>
    %9 = arith.truncf %8 : vector<32x128xf32> to vector<32x128xbf16>
    %c0_6 = arith.constant 0 : index
    %c0_7 = arith.constant 0 : index
    %10 = vector.load %arg4[%c0_6, %c0_7] : memref<128x128xbf16, #tpu.memory_space<vmem>>, vector<128x128xbf16>
    %cst_8 = arith.constant dense<0.000000e+00> : vector<32x128xf32>
    %11 = tpu.matmul %9, %10, %cst_8 {dimension_numbers = #tpu.dot_dimension_numbers<[1], [0], [0], [1], [0, 0, 1, 1], [], []>} : vector<32x128xbf16>, vector<128x128xbf16>, vector<32x128xf32> -> vector<32x128xf32>
    %cst_9 = arith.constant 0.000000e+00 : f32
    %12 = vector.broadcast %cst_9 : f32 to vector<32x128xf32>
    %13 = arith.maximumf %11, %12 : vector<32x128xf32>
    %14 = arith.truncf %13 : vector<32x128xf32> to vector<32x128xbf16>
    %c0_10 = arith.constant 0 : index
    %c0_11 = arith.constant 0 : index
    %15 = vector.load %arg5[%c0_10, %c0_11] : memref<128x10xbf16, #tpu.memory_space<vmem>>, vector<128x10xbf16>
    %cst_12 = arith.constant dense<0.000000e+00> : vector<32x10xf32>
    %16 = tpu.matmul %14, %15, %cst_12 {dimension_numbers = #tpu.dot_dimension_numbers<[1], [0], [0], [1], [0, 0, 1, 1], [], []>} : vector<32x128xbf16>, vector<128x10xbf16>, vector<32x10xf32> -> vector<32x10xf32>
    %c0_13 = arith.constant 0 : index
    %c0_14 = arith.constant 0 : index
    %17 = vector.load %arg6[%c0_13, %c0_14] : memref<32x10xf32, #tpu.memory_space<vmem>>, vector<32x10xf32>
    tpu.vector_store %arg6[%c0_13, %c0_14], %16 {strides = array<i32>} : memref<32x10xf32, #tpu.memory_space<vmem>>, vector<32x10xf32>,
    return
  }
  func.func @transform_0(%arg0: i32) -> (i32, i32) {
    %c0_i32 = arith.constant 0 : i32
    %c0_i32_0 = arith.constant 0 : i32
    return %arg0, %c0_i32 : i32, i32
  }
  func.func @transform_1(%arg0: i32) -> (i32, i32) {
    %c0_i32 = arith.constant 0 : i32
    %c0_i32_0 = arith.constant 0 : i32
    %c0_i32_1 = arith.constant 0 : i32
    return %c0_i32, %c0_i32_0 : i32, i32
  }
  func.func @transform_2(%arg0: i32) -> (i32, i32) {
    %c0_i32 = arith.constant 0 : i32
    %c0_i32_0 = arith.constant 0 : i32
    %c0_i32_1 = arith.constant 0 : i32
    return %c0_i32, %c0_i32_0 : i32, i32
  }
  func.func @transform_3(%arg0: i32) -> (i32, i32) {
    %c0_i32 = arith.constant 0 : i32
    %c0_i32_0 = arith.constant 0 : i32
    %c0_i32_1 = arith.constant 0 : i32
    return %c0_i32, %c0_i32_0 : i32, i32
  }
  func.func @transform_4(%arg0: i32) -> (i32, i32) {
    %c0_i32 = arith.constant 0 : i32
    %c0_i32_0 = arith.constant 0 : i32
    %c0_i32_1 = arith.constant 0 : i32
    return %c0_i32, %c0_i32_0 : i32, i32
  }
  func.func @transform_5(%arg0: i32) -> (i32, i32) {
    %c0_i32 = arith.constant 0 : i32
    %c0_i32_0 = arith.constant 0 : i32
    return %arg0, %c0_i32 : i32, i32
  }
}

</mosaic_0001>

<llo_original>
// kernel: gesture_net_forward.1
$region0: #{gesture_net_forward.1}
  #allocation0 [shape = 'u32[]', space=smem, size = 0x4, offset = 0x4, fixed_abs, tag = 'smem constant byte address 0x4 - core index']
  #allocation1 [shape = 'u32[144,128]{1,0:T(1,128)}', space=vmem, size = 0x12000, scoped, tag = 'internal scratch']
  %s0 = inlined_call_operand.vmem [shape: f32[128,63], index: 0, kind: input, shape index: {}]
  %s1 = inlined_call_operand.vmem [shape: bf16[63,128], index: 1, kind: input, shape index: {}]
  %s2 = inlined_call_operand.vmem [shape: f32[1,128], index: 2, kind: input, shape index: {}]
  %s3 = inlined_call_operand.vmem [shape: bf16[128,128], index: 3, kind: input, shape index: {}]
  %s4 = inlined_call_operand.vmem [shape: bf16[128,10], index: 4, kind: input, shape index: {}]
  %s5 = inlined_call_operand.vmem [shape: f32[128,10], index: 5, kind: output, shape index: {}]
  %s6 = sld [smem:[#allocation0]]
  $region53: #{gesture_net_forward.1} parent=0
    _
  %s8 = ssub.s32 1, %s6
  %s9 = scalar_select 0, %s8, %s6
  loop: start=0, step=1, limit=6
  $region2: #{gesture_net_forward.1} parent=0 // loop_pre_header
    _
  $region3: #{gesture_net_forward.1} parent=0 // loop_header
    %s11 = sphi 0, %s15
    %p12 = scmp.ge.s32.totalorder %s11, 6
    %s21 = sphi 0, %s23
    %s24 = sphi 0, %s21
    %s25 = sphi 0, %s24
    %s41 = sphi 0, %s25
    %s45 = sphi 0, %s45
    %s47 = sphi 0, %s45
    %s48 = sphi 0, %s47
    %s62 = sphi 0, %s48
    %s66 = sphi 0, %s66
    %s68 = sphi 0, %s66
    %s69 = sphi 0, %s68
    %s83 = sphi 0, %s69
    %s87 = sphi 0, %s87
    %s89 = sphi 0, %s87
    %s90 = sphi 0, %s89
    %s104 = sphi 0, %s90
    %s108 = sphi 0, %s108
    %s110 = sphi 0, %s108
    %s111 = sphi 0, %s110
    %s125 = sphi 0, %s111
    %s131 = sphi 0, %s133
    %s134 = sphi 0, %s131
    %s135 = sphi 0, %s134
    %s151 = sphi 0, %s135
  $region4: #{gesture_net_forward.1} parent=0 // loop_header_branch
    %14 = sbr.rel (%p12) target = $region8
  $region5: #{gesture_net_forward.1} parent=0 // loop_body
    %s16 = ssub.s32 %s11, 1
    %s17 = ssub.s32 %s11, 2
    %s18 = sadd.s32 %s11, 1
    %s19 = ssub.s32 %s11, %s18
    %p20 = scmp.eq.s32.totalorder %s19, 0
    %s22 = sadd.s32 %s21, 1
    %s23 = scalar_select %p20, %s21, %s22
    %p26 = pneg %p20
    %p27 = scmp.eq.s32.totalorder %s11, 3
    %p28 = por %p26, %p27
    %p29 = scmp.ne.s32.totalorder %s21, %s24
    %p30 = scmp.eq.s32.totalorder %s11, 0
    %p31 = por %p29, %p30
    %p32 = scmp.ne.s32.totalorder %s21, %s24
    %p33 = scmp.eq.s32.totalorder %s16, 3
    %p34 = por %p32, %p33
    %p35 = scmp.ne.s32.totalorder %s24, %s25
    %p36 = scmp.eq.s32.totalorder %s16, 0
    %p37 = por %p35, %p36
    %p38 = scmp.ne.s32.totalorder %s24, %s25
    %p39 = scmp.eq.s32.totalorder %s17, 3
    %p40 = por %p38, %p39
    %p42 = scmp.ne.s32.totalorder %s25, %s41
    %p43 = scmp.eq.s32.totalorder %s17, 0
    %p44 = por %p42, %p43
    %s46 = sadd.s32 %s45, 1
    %p49 = scmp.eq.s32.totalorder %s11, 3
    %p50 = scmp.ne.s32.totalorder %s45, %s47
    %p51 = scmp.eq.s32.totalorder %s11, 0
    %p52 = por %p50, %p51
    %p53 = scmp.ne.s32.totalorder %s45, %s47
    %p54 = scmp.eq.s32.totalorder %s16, 3
    %p55 = por %p53, %p54
    %p56 = scmp.ne.s32.totalorder %s47, %s48
    %p57 = scmp.eq.s32.totalorder %s16, 0
    %p58 = por %p56, %p57
    %p59 = scmp.ne.s32.totalorder %s47, %s48
    %p60 = scmp.eq.s32.totalorder %s17, 3
    %p61 = por %p59, %p60
    %p63 = scmp.ne.s32.totalorder %s48, %s62
    %p64 = scmp.eq.s32.totalorder %s17, 0
    %p65 = por %p63, %p64
    %s67 = sadd.s32 %s66, 1
    %p70 = scmp.eq.s32.totalorder %s11, 3
    %p71 = scmp.ne.s32.totalorder %s66, %s68
    %p72 = scmp.eq.s32.totalorder %s11, 0
    %p73 = por %p71, %p72
    %p74 = scmp.ne.s32.totalorder %s66, %s68
    %p75 = scmp.eq.s32.totalorder %s16, 3
    %p76 = por %p74, %p75
    %p77 = scmp.ne.s32.totalorder %s68, %s69
    %p78 = scmp.eq.s32.totalorder %s16, 0
    %p79 = por %p77, %p78
    %p80 = scmp.ne.s32.totalorder %s68, %s69
    %p81 = scmp.eq.s32.totalorder %s17, 3
    %p82 = por %p80, %p81
    %p84 = scmp.ne.s32.totalorder %s69, %s83
    %p85 = scmp.eq.s32.totalorder %s17, 0
    %p86 = por %p84, %p85
    %s88 = sadd.s32 %s87, 1
    %p91 = scmp.eq.s32.totalorder %s11, 3
    %p92 = scmp.ne.s32.totalorder %s87, %s89
    %p93 = scmp.eq.s32.totalorder %s11, 0
    %p94 = por %p92, %p93
    %p95 = scmp.ne.s32.totalorder %s87, %s89
    %p96 = scmp.eq.s32.totalorder %s16, 3
    %p97 = por %p95, %p96
    %p98 = scmp.ne.s32.totalorder %s89, %s90
    %p99 = scmp.eq.s32.totalorder %s16, 0
    %p100 = por %p98, %p99
    %p101 = scmp.ne.s32.totalorder %s89, %s90
    %p102 = scmp.eq.s32.totalorder %s17, 3
    %p103 = por %p101, %p102
    %p105 = scmp.ne.s32.totalorder %s90, %s104
    %p106 = scmp.eq.s32.totalorder %s17, 0
    %p107 = por %p105, %p106
    %s109 = sadd.s32 %s108, 1
    %p112 = scmp.eq.s32.totalorder %s11, 3
    %p113 = scmp.ne.s32.totalorder %s108, %s110
    %p114 = scmp.eq.s32.totalorder %s11, 0
    %p115 = por %p113, %p114
    %p116 = scmp.ne.s32.totalorder %s108, %s110
    %p117 = scmp.eq.s32.totalorder %s16, 3
    %p118 = por %p116, %p117
    %p119 = scmp.ne.s32.totalorder %s110, %s111
    %p120 = scmp.eq.s32.totalorder %s16, 0
    %p121 = por %p119, %p120
    %p122 = scmp.ne.s32.totalorder %s110, %s111
    %p123 = scmp.eq.s32.totalorder %s17, 3
    %p124 = por %p122, %p123
    %p126 = scmp.ne.s32.totalorder %s111, %s125
    %p127 = scmp.eq.s32.totalorder %s17, 0
    %p128 = por %p126, %p127
    %s129 = ssub.s32 %s11, %s18
    %p130 = scmp.eq.s32.totalorder %s129, 0
    %s132 = sadd.s32 %s131, 1
    %s133 = scalar_select %p130, %s131, %s132
    %p136 = pneg %p130
    %p137 = scmp.eq.s32.totalorder %s11, 3
    %p138 = por %p136, %p137
    %p139 = scmp.ne.s32.totalorder %s131, %s134
    %p140 = scmp.eq.s32.totalorder %s11, 0
    %p141 = por %p139, %p140
    %p142 = scmp.ne.s32.totalorder %s131, %s134
    %p143 = scmp.eq.s32.totalorder %s16, 3
    %p144 = por %p142, %p143
    %p145 = scmp.ne.s32.totalorder %s134, %s135
    %p146 = scmp.eq.s32.totalorder %s16, 0
    %p147 = por %p145, %p146
    %p148 = scmp.ne.s32.totalorder %s134, %s135
    %p149 = scmp.eq.s32.totalorder %s17, 3
    %p150 = por %p148, %p149
    %p152 = scmp.ne.s32.totalorder %s135, %s151
    %p153 = scmp.eq.s32.totalorder %s17, 0
    %p154 = por %p152, %p153
    %p155 = scmp.le.s32.totalorder 1, %s11
    %p156 = scmp.lt.s32.totalorder %s11, 5
    %p157 = pnand %p155, %p156
    %p158 = pneg %p157
    // Predicated region
    $region9: #{gesture_net_forward.1} parent=5 // pred_check
      _
    $region10: #{gesture_net_forward.1} parent=5 // pred_check_branch
      %160 = sbr.rel (%p157) target = $region12
    $region11: #{gesture_net_forward.1} parent=5 // pred_region
      %s161 = ssub.s32 %s11, 1
      // Predicated region
      $region13: #{gesture_net_forward.1} parent=11 // pred_check
        %p162 = pneg %p58
      $region14: #{gesture_net_forward.1} parent=11 // pred_check_branch
        %164 = sbr.rel (%p162) target = $region16
      $region15: #{gesture_net_forward.1} parent=11 // pred_region
        _
      $region16: #{gesture_net_forward.1} parent=11 // pred_fallthru
        _
      // Predicated region
      $region17: #{gesture_net_forward.1} parent=11 // pred_check
        %p165 = pneg %p79
      $region18: #{gesture_net_forward.1} parent=11 // pred_check_branch
        %167 = sbr.rel (%p165) target = $region20
      $region19: #{gesture_net_forward.1} parent=11 // pred_region
        _
      $region20: #{gesture_net_forward.1} parent=11 // pred_fallthru
        _
      // Predicated region
      $region21: #{gesture_net_forward.1} parent=11 // pred_check
        %p168 = pneg %p100
      $region22: #{gesture_net_forward.1} parent=11 // pred_check_branch
        %170 = sbr.rel (%p168) target = $region24
      $region23: #{gesture_net_forward.1} parent=11 // pred_region
        _
      $region24: #{gesture_net_forward.1} parent=11 // pred_fallthru
        _
      // Predicated region
      $region25: #{gesture_net_forward.1} parent=11 // pred_check
        %p171 = pneg %p121
      $region26: #{gesture_net_forward.1} parent=11 // pred_check_branch
        %173 = sbr.rel (%p171) target = $region28
      $region27: #{gesture_net_forward.1} parent=11 // pred_region
        _
      $region28: #{gesture_net_forward.1} parent=11 // pred_fallthru
        _
    $region12: #{gesture_net_forward.1} parent=5 // pred_fallthru
      _
    %p174 = scmp.lt.s32.totalorder %s11, 4
    // Predicated region
    $region29: #{gesture_net_forward.1} parent=5 // pred_check
      %p175 = pneg %p174
    $region30: #{gesture_net_forward.1} parent=5 // pred_check_branch
      %177 = sbr.rel (%p175) target = $region32
    $region31: #{gesture_net_forward.1} parent=5 // pred_region
      // Predicated region
      $region33: #{gesture_net_forward.1} parent=31 // pred_check
        %p178 = pneg %p31
      $region34: #{gesture_net_forward.1} parent=31 // pred_check_branch
        %180 = sbr.rel (%p178) target = $region36
      $region35: #{gesture_net_forward.1} parent=31 // pred_region
        %s181 = smul.u32 4, %s11
        %p182 = scmp.lt.s32.totalorder %s181, 15
        %s183 = scalar_select %p182, %s181, 15
        %s184 = smul.addr %s183, 8
        %s185 = scalar_lea.vmem %s0, %s184
        %s186 = smul.u32 4, %s11
      $region36: #{gesture_net_forward.1} parent=31 // pred_fallthru
        _
    $region32: #{gesture_net_forward.1} parent=5 // pred_fallthru
      _
    %p187 = scmp.le.s32.totalorder 1, %s11
    %p188 = scmp.lt.s32.totalorder %s11, 5
    %p189 = pnand %p187, %p188
    %p190 = pneg %p189
    // Predicated region
    $region37: #{gesture_net_forward.1} parent=5 // pred_check
      _
    $region38: #{gesture_net_forward.1} parent=5 // pred_check_branch
      %192 = sbr.rel (%p189) target = $region40
    $region39: #{gesture_net_forward.1} parent=5 // pred_region
      %s193 = ssub.s32 %s11, 1
      %s194 = smul.u32 4, %s16
      %p195 = scmp.lt.s32.totalorder %s194, 15
      %s196 = scalar_select %p195, %s194, 15
      %s197 = smul.addr %s196, 8
      %s198 = scalar_lea.vmem %s0, %s197
      %p199 = pneg %p37
      %p200 = pneg %p34
      %p201 = pneg %p58
      %p202 = pneg %p55
      %p203 = pneg %p79
      %p204 = pneg %p76
      %p205 = pneg %p100
      %p206 = pneg %p97
      %p207 = pneg %p121
      %p208 = pneg %p118
      %p209 = pneg %p147
      %p210 = pneg %p144
      %s211 = smul.u32 4, %s16
      %p212 = scmp.lt.s32.totalorder %s211, 15
      %s213 = scalar_select %p212, %s211, 15
      %s214 = smul.addr %s213, 8
      %s215 = scalar_lea.vmem %s5, %s214
      %s216 = smul.u32 4, %s16
      %p217 = scmp.lt.s32.totalorder %s216, 15
      %s218 = scalar_select %p217, %s216, 15
      %s219 = smul.addr %s218, 8
      %s220 = scalar_lea.vmem %s0, %s219
      %s221 = smul.u32 4, %s16
      %s222 = smul.u32 4, %s16
      %p223 = scmp.lt.s32.totalorder %s222, 15
      %s224 = scalar_select %p223, %s222, 15
      %s225 = smul.addr %s224, 8
      %s226 = scalar_lea.vmem %s5, %s225
      %s227 = smul.u32 4, %s16
      %v229 = vld [vmem:[%s220] sm:$0xff]
      %v230 = vld [vmem:[%s220 + $0x8] sm:$0xff]
      %v231 = vld [vmem:[%s220 + $0x10] sm:$0xff]
      %v232 = vld [vmem:[%s220 + $0x18] sm:$0xff]
      %v233 = vpack.c.bf16 %v230, %v229
      %v234 = vpack.c.bf16 %v232, %v231
      %v235 = vld [vmem:[%s1] sm:$0xf]
      %v236 = vld [vmem:[%s1 + $0x4] sm:$0xf]
      %v237 = vld [vmem:[%s1 + $0x8] sm:$0xf]
      %v238 = vld [vmem:[%s1 + $0xc] sm:$0xf]
      %v239 = vld [vmem:[%s1 + $0x10] sm:$0xf]
      %v240 = vld [vmem:[%s1 + $0x14] sm:$0xf]
      %v241 = vld [vmem:[%s1 + $0x18] sm:$0xf]
      %v242 = vld [vmem:[%s1 + $0x1c] sm:$0xf]
      %v243 = vld [vmem:[%s2] sm:$0x1]
      %v245 = vlaneseq
      %v246 = vshrl.u32 %v245, 7
      %v247 = vsub.s32 0, %v246
      %v248 = vrot.slane %v243, %v247
      %v258 = vunpack.c.l.b16 %v235
      %v259 = vunpack.c.l.b16 %v236
      %v260 = vunpack.c.l.b16 %v237
      %v261 = vunpack.c.l.b16 %v238
      %v262 = vunpack.c.l.b16 %v239
      %v263 = vunpack.c.l.b16 %v240
      %v264 = vunpack.c.l.b16 %v241
      %v265 = vunpack.c.l.b16 %v242
      %v266 = vpack.c.b16 %v259, %v258
      %v267 = vpack.c.b16 %v261, %v260
      %v268 = vpack.c.b16 %v263, %v262
      %v269 = vpack.c.b16 %v265, %v264
      %vm273 = vcmask 515072
      %v275 = vsel %vm273, %v233, 0
      %v278 = vsel %vm273, %v234, 0
      %vm280 = vcmask 1046528
      %vm281 = vcmask 1047552
      %v282 = vsel %vm280, 4294967295, 65535
      %v283 = vsel %vm281, %v282, 0
      %v285 = vand.u32 %v269, %v283
      %287 = vmatprep.subr.bf16.mxu0 0
      %288 = vmatpush1.bf16.msra.mxu0 %v266
      %289 = vmatprep.subr.bf16.mxu0 0
      %290 = vmatpush1.bf16.msra.mxu0 %v267
      %291 = vmatprep.subr.bf16.mxu0 0
      %292 = vmatpush1.bf16.msra.mxu0 %v268
      %293 = vmatprep.subr.bf16.mxu0 0
      %294 = vmatpush1.bf16.msra.mxu0 %v285
      %295 = vmatprep.subr.bf16.mxu0 0
      %296 = vmatpush1.bf16.msra.mxu0 0
      %297 = vmatprep.subr.bf16.mxu0 0
      %298 = vmatpush1.bf16.msra.mxu0 0
      %299 = vmatprep.subr.bf16.mxu0 0
      %300 = vmatpush1.bf16.msra.mxu0 0
      %301 = vmatprep.subr.bf16.mxu0 0
      %302 = vmatpush1.bf16.msra.mxu0 0
      %303 = vmatprep.subr.bf16.mxu0 0
      %304 = vmatpush1.bf16.msra.mxu0 0
      %305 = vmatprep.subr.bf16.mxu0 0
      %306 = vmatpush1.bf16.msra.mxu0 0
      %307 = vmatprep.subr.bf16.mxu0 0
      %308 = vmatpush1.bf16.msra.mxu0 0
      %309 = vmatprep.subr.bf16.mxu0 0
      %310 = vmatpush1.bf16.msra.mxu0 0
      %311 = vmatprep.subr.bf16.mxu0 0
      %312 = vmatpush1.bf16.msra.mxu0 0
      %313 = vmatprep.subr.bf16.mxu0 0
      %314 = vmatpush1.bf16.msra.mxu0 0
      %315 = vmatprep.subr.bf16.mxu0 0
      %316 = vmatpush1.bf16.msra.mxu0 0
      %317 = vmatprep.subr.bf16.mxu0 0
      %318 = vmatpush1.bf16.msra.mxu0 0
      %319 = vmatprep.mubr.bf16.mxu0 0
      %320 = vmatmul.mubr.bf16.gmra.mrb[0].mxu0 %v275
      %v321 = vpop.f32.mrb[0].mxu0
      %v322 = vadd.f32 %v248, %v321
      %v323 = vpop.f32.mrb[0].mxu0
      %v324 = vpop.f32.mrb[0].mxu0
      %v325 = vadd.f32 %v248, %v324
      %v326 = vpop.f32.mrb[0].mxu0
      %327 = vmatprep.mubr.bf16.mxu0 0
      %328 = vmatmul.mubr.bf16.gmra.mrb[0].mxu0 %v278
      %v329 = vpop.f32.mrb[0].mxu0
      %v330 = vadd.f32 %v248, %v329
      %v331 = vpop.f32.mrb[0].mxu0
      %v332 = vpop.f32.mrb[0].mxu0
      %v333 = vadd.f32 %v248, %v332
      %v334 = vpop.f32.mrb[0].mxu0
      %335 = vdwg.mxu0
      %v336 = vmax.f32 %v322, 0.0
      %v337 = vmax.f32 %v325, 0.0
      %v338 = vmax.f32 %v330, 0.0
      %v339 = vmax.f32 %v333, 0.0
      %v340 = vpack.c.bf16 %v337, %v336
      %v341 = vpack.c.bf16 %v339, %v338
      %v342 = vld [vmem:[%s3] sm:$0xf]
      %v343 = vld [vmem:[%s3 + $0x4] sm:$0xf]
      %v344 = vld [vmem:[%s3 + $0x8] sm:$0xf]
      %v345 = vld [vmem:[%s3 + $0xc] sm:$0xf]
      %v346 = vld [vmem:[%s3 + $0x10] sm:$0xf]
      %v347 = vld [vmem:[%s3 + $0x14] sm:$0xf]
      %v348 = vld [vmem:[%s3 + $0x18] sm:$0xf]
      %v349 = vld [vmem:[%s3 + $0x1c] sm:$0xf]
      %v350 = vld [vmem:[%s3 + $0x20] sm:$0xf]
      %v351 = vld [vmem:[%s3 + $0x24] sm:$0xf]
      %v352 = vld [vmem:[%s3 + $0x28] sm:$0xf]
      %v353 = vld [vmem:[%s3 + $0x2c] sm:$0xf]
      %v354 = vld [vmem:[%s3 + $0x30] sm:$0xf]
      %v355 = vld [vmem:[%s3 + $0x34] sm:$0xf]
      %v356 = vld [vmem:[%s3 + $0x38] sm:$0xf]
      %v357 = vld [vmem:[%s3 + $0x3c] sm:$0xf]
      %v374 = vunpack.c.l.b16 %v342
      %v375 = vunpack.c.l.b16 %v343
      %v376 = vunpack.c.l.b16 %v344
      %v377 = vunpack.c.l.b16 %v345
      %v378 = vunpack.c.l.b16 %v346
      %v379 = vunpack.c.l.b16 %v347
      %v380 = vunpack.c.l.b16 %v348
      %v381 = vunpack.c.l.b16 %v349
      %v382 = vunpack.c.l.b16 %v350
      %v383 = vunpack.c.l.b16 %v351
      %v384 = vunpack.c.l.b16 %v352
      %v385 = vunpack.c.l.b16 %v353
      %v386 = vunpack.c.l.b16 %v354
      %v387 = vunpack.c.l.b16 %v355
      %v388 = vunpack.c.l.b16 %v356
      %v389 = vunpack.c.l.b16 %v357
      %v390 = vpack.c.b16 %v375, %v374
      %v391 = vpack.c.b16 %v377, %v376
      %v392 = vpack.c.b16 %v379, %v378
      %v393 = vpack.c.b16 %v381, %v380
      %v394 = vpack.c.b16 %v383, %v382
      %v395 = vpack.c.b16 %v385, %v384
      %v396 = vpack.c.b16 %v387, %v386
      %v397 = vpack.c.b16 %v389, %v388
      %406 = vmatprep.subr.bf16.mxu0 0
      %407 = vmatpush1.bf16.msra.mxu0 %v390
      %408 = vmatprep.subr.bf16.mxu0 0
      %409 = vmatpush1.bf16.msra.mxu0 %v391
      %410 = vmatprep.subr.bf16.mxu0 0
      %411 = vmatpush1.bf16.msra.mxu0 %v392
      %412 = vmatprep.subr.bf16.mxu0 0
      %413 = vmatpush1.bf16.msra.mxu0 %v393
      %414 = vmatprep.subr.bf16.mxu0 0
      %415 = vmatpush1.bf16.msra.mxu0 %v394
      %416 = vmatprep.subr.bf16.mxu0 0
      %417 = vmatpush1.bf16.msra.mxu0 %v395
      %418 = vmatprep.subr.bf16.mxu0 0
      %419 = vmatpush1.bf16.msra.mxu0 %v396
      %420 = vmatprep.subr.bf16.mxu0 0
      %421 = vmatpush1.bf16.msra.mxu0 %v397
      %422 = vmatprep.subr.bf16.mxu0 0
      %423 = vmatpush1.bf16.msra.mxu0 0
      %424 = vmatprep.subr.bf16.mxu0 0
      %425 = vmatpush1.bf16.msra.mxu0 0
      %426 = vmatprep.subr.bf16.mxu0 0
      %427 = vmatpush1.bf16.msra.mxu0 0
      %428 = vmatprep.subr.bf16.mxu0 0
      %429 = vmatpush1.bf16.msra.mxu0 0
      %430 = vmatprep.subr.bf16.mxu0 0
      %431 = vmatpush1.bf16.msra.mxu0 0
      %432 = vmatprep.subr.bf16.mxu0 0
      %433 = vmatpush1.bf16.msra.mxu0 0
      %434 = vmatprep.subr.bf16.mxu0 0
      %435 = vmatpush1.bf16.msra.mxu0 0
      %436 = vmatprep.subr.bf16.mxu0 0
      %437 = vmatpush1.bf16.msra.mxu0 0
      %438 = vmatprep.mubr.bf16.mxu0 0
      %439 = vmatmul.mubr.bf16.gmra.mrb[0].mxu0 %v340
      %v440 = vpop.f32.mrb[0].mxu0
      %v441 = vadd.f32 0.0, %v440
      %v442 = vpop.f32.mrb[0].mxu0
      %v443 = vpop.f32.mrb[0].mxu0
      %v444 = vadd.f32 0.0, %v443
      %v445 = vpop.f32.mrb[0].mxu0
      %446 = vmatprep.mubr.bf16.mxu0 0
      %447 = vmatmul.mubr.bf16.gmra.mrb[0].mxu0 %v341
      %v448 = vpop.f32.mrb[0].mxu0
      %v449 = vadd.f32 0.0, %v448
      %v450 = vpop.f32.mrb[0].mxu0
      %v451 = vpop.f32.mrb[0].mxu0
      %v452 = vadd.f32 0.0, %v451
      %v453 = vpop.f32.mrb[0].mxu0
      %454 = vdwg.mxu0
      %v455 = vmax.f32 %v441, 0.0
      %v456 = vmax.f32 %v444, 0.0
      %v457 = vmax.f32 %v449, 0.0
      %v458 = vmax.f32 %v452, 0.0
      %v459 = vpack.c.bf16 %v456, %v455
      %v460 = vpack.c.bf16 %v458, %v457
      %v461 = vld [vmem:[%s4] sm:$0xf]
      %v462 = vld [vmem:[%s4 + $0x4] sm:$0xf]
      %v463 = vld [vmem:[%s4 + $0x8] sm:$0xf]
      %v464 = vld [vmem:[%s4 + $0xc] sm:$0xf]
      %v465 = vld [vmem:[%s4 + $0x10] sm:$0xf]
      %v466 = vld [vmem:[%s4 + $0x14] sm:$0xf]
      %v467 = vld [vmem:[%s4 + $0x18] sm:$0xf]
      %v468 = vld [vmem:[%s4 + $0x1c] sm:$0xf]
      %v469 = vld [vmem:[%s4 + $0x20] sm:$0xf]
      %v470 = vld [vmem:[%s4 + $0x24] sm:$0xf]
      %v471 = vld [vmem:[%s4 + $0x28] sm:$0xf]
      %v472 = vld [vmem:[%s4 + $0x2c] sm:$0xf]
      %v473 = vld [vmem:[%s4 + $0x30] sm:$0xf]
      %v474 = vld [vmem:[%s4 + $0x34] sm:$0xf]
      %v475 = vld [vmem:[%s4 + $0x38] sm:$0xf]
      %v476 = vld [vmem:[%s4 + $0x3c] sm:$0xf]
      %v493 = vunpack.c.l.b16 %v461
      %v494 = vunpack.c.l.b16 %v462
      %v495 = vunpack.c.l.b16 %v463
      %v496 = vunpack.c.l.b16 %v464
      %v497 = vunpack.c.l.b16 %v465
      %v498 = vunpack.c.l.b16 %v466
      %v499 = vunpack.c.l.b16 %v467
      %v500 = vunpack.c.l.b16 %v468
      %v501 = vunpack.c.l.b16 %v469
      %v502 = vunpack.c.l.b16 %v470
      %v503 = vunpack.c.l.b16 %v471
      %v504 = vunpack.c.l.b16 %v472
      %v505 = vunpack.c.l.b16 %v473
      %v506 = vunpack.c.l.b16 %v474
      %v507 = vunpack.c.l.b16 %v475
      %v508 = vunpack.c.l.b16 %v476
      %v509 = vpack.c.b16 %v494, %v493
      %v510 = vpack.c.b16 %v496, %v495
      %v511 = vpack.c.b16 %v498, %v497
      %v512 = vpack.c.b16 %v500, %v499
      %v513 = vpack.c.b16 %v502, %v501
      %v514 = vpack.c.b16 %v504, %v503
      %v515 = vpack.c.b16 %v506, %v505
      %v516 = vpack.c.b16 %v508, %v507
      %525 = vmatprep.subr.bf16.mxu0 0
      %526 = vmatpush1.bf16.msra.mxu0 %v509
      %527 = vmatprep.subr.bf16.mxu0 0
      %528 = vmatpush1.bf16.msra.mxu0 %v510
      %529 = vmatprep.subr.bf16.mxu0 0
      %530 = vmatpush1.bf16.msra.mxu0 %v511
      %531 = vmatprep.subr.bf16.mxu0 0
      %532 = vmatpush1.bf16.msra.mxu0 %v512
      %533 = vmatprep.subr.bf16.mxu0 0
      %534 = vmatpush1.bf16.msra.mxu0 %v513
      %535 = vmatprep.subr.bf16.mxu0 0
      %536 = vmatpush1.bf16.msra.mxu0 %v514
      %537 = vmatprep.subr.bf16.mxu0 0
      %538 = vmatpush1.bf16.msra.mxu0 %v515
      %539 = vmatprep.subr.bf16.mxu0 0
      %540 = vmatpush1.bf16.msra.mxu0 %v516
      %541 = vmatprep.subr.bf16.mxu0 0
      %542 = vmatpush1.bf16.msra.mxu0 0
      %543 = vmatprep.subr.bf16.mxu0 0
      %544 = vmatpush1.bf16.msra.mxu0 0
      %545 = vmatprep.subr.bf16.mxu0 0
      %546 = vmatpush1.bf16.msra.mxu0 0
      %547 = vmatprep.subr.bf16.mxu0 0
      %548 = vmatpush1.bf16.msra.mxu0 0
      %549 = vmatprep.subr.bf16.mxu0 0
      %550 = vmatpush1.bf16.msra.mxu0 0
      %551 = vmatprep.subr.bf16.mxu0 0
      %552 = vmatpush1.bf16.msra.mxu0 0
      %553 = vmatprep.subr.bf16.mxu0 0
      %554 = vmatpush1.bf16.msra.mxu0 0
      %555 = vmatprep.subr.bf16.mxu0 0
      %556 = vmatpush1.bf16.msra.mxu0 0
      %557 = vmatprep.mubr.bf16.mxu0 0
      %558 = vmatmul.mubr.bf16.gmra.mrb[0].mxu0 %v459
      %v559 = vpop.f32.mrb[0].mxu0
      %v560 = vadd.f32 0.0, %v559
      %v561 = vpop.f32.mrb[0].mxu0
      %v562 = vpop.f32.mrb[0].mxu0
      %v563 = vadd.f32 0.0, %v562
      %v564 = vpop.f32.mrb[0].mxu0
      %565 = vmatprep.mubr.bf16.mxu0 0
      %566 = vmatmul.mubr.bf16.gmra.mrb[0].mxu0 %v460
      %v567 = vpop.f32.mrb[0].mxu0
      %v568 = vadd.f32 0.0, %v567
      %v569 = vpop.f32.mrb[0].mxu0
      %v570 = vpop.f32.mrb[0].mxu0
      %v571 = vadd.f32 0.0, %v570
      %v572 = vpop.f32.mrb[0].mxu0
      %573 = vdwg.mxu0
      %vm574 = vcmask 80896
      %575 = vst.msk [vmem:[%s226] sm:$0xff] %vm574, %v560
      %576 = vst.msk [vmem:[%s226 + $0x8] sm:$0xff] %vm574, %v563
      %577 = vst.msk [vmem:[%s226 + $0x10] sm:$0xff] %vm574, %v568
      %578 = vst.msk [vmem:[%s226 + $0x18] sm:$0xff] %vm574, %v571
      %s579 = smul.u32 4, %s16
      %p580 = scmp.lt.s32.totalorder %s579, 15
      %s581 = scalar_select %p580, %s579, 15
      %s582 = smul.addr %s581, 8
      %s583 = scalar_lea.vmem %s5, %s582
      // Predicated region
      $region41: #{gesture_net_forward.1} parent=39 // pred_check
        %p584 = pneg %p144
      $region42: #{gesture_net_forward.1} parent=39 // pred_check_branch
        %586 = sbr.rel (%p584) target = $region44
      $region43: #{gesture_net_forward.1} parent=39 // pred_region
        %s587 = smul.u32 4, %s16
      $region44: #{gesture_net_forward.1} parent=39 // pred_fallthru
        _
    $region40: #{gesture_net_forward.1} parent=5 // pred_fallthru
      _
    %p588 = scmp.le.s32.totalorder 2, %s11
    // Predicated region
    $region45: #{gesture_net_forward.1} parent=5 // pred_check
      %p589 = pneg %p588
    $region46: #{gesture_net_forward.1} parent=5 // pred_check_branch
      %591 = sbr.rel (%p589) target = $region48
    $region47: #{gesture_net_forward.1} parent=5 // pred_region
      %s592 = ssub.s32 %s11, 2
      // Predicated region
      $region49: #{gesture_net_forward.1} parent=47 // pred_check
        %p593 = pneg %p150
      $region50: #{gesture_net_forward.1} parent=47 // pred_check_branch
        %595 = sbr.rel (%p593) target = $region52
      $region51: #{gesture_net_forward.1} parent=47 // pred_region
        %s596 = smul.u32 4, %s17
        %p597 = scmp.lt.s32.totalorder %s596, 15
        %s598 = scalar_select %p597, %s596, 15
        %s599 = smul.addr %s598, 8
        %s600 = scalar_lea.vmem %s5, %s599
      $region52: #{gesture_net_forward.1} parent=47 // pred_fallthru
        _
    $region48: #{gesture_net_forward.1} parent=5 // pred_fallthru
      _
  $region6: #{gesture_net_forward.1} parent=0 // loop_footer
    %s15 = sadd.s32 1, %s11
  $region7: #{gesture_net_forward.1} parent=0 // loop_footer_branch
    %10 = sbr.rel target = $region3
  $region8: #{gesture_net_forward.1} parent=0 // loop_exit
    _

</llo_original>
